<compile_context>
chip_gen: v7x
topology: tpu7x:2x2x1
jax: 0.10.0
libtpu: 0.0.40
codegen_flags: <defaults>
</compile_context>

<pallas_src>
import functools

import jax
import jax.numpy as jnp
from jax.experimental import pallas as pl
from jax.experimental.pallas import tpu as pltpu


def _round_up(x, m):
    return ((x + m - 1) // m) * m


_SUBLANE = 16  # bf16 sublane packing; also a multiple of the f32 requirement (8)


# ----------------------------- Pallas kernel ------------------------------- #
def _bands_kernel(x_ref, w1_ref, b1_ref, w2_ref, b2_ref, w3_ref, b3_ref, o_ref):
    # x_ref: [tm, B] bf16 rows of the flattened [N*S, B] input.
    x = x_ref[...]

    # conv1 (im2col folded into w1): bf16 x bf16 -> f32 accumulate; f32 bias+ReLU.
    h1 = jnp.dot(x, w1_ref[...], preferred_element_type=jnp.float32)
    h1 = jnp.maximum(h1 + b1_ref[...], 0.0)               # [tm, C1*P1] f32

    # conv2 (width-1 output == dense); BN1 affine pre-folded into w2/b2.
    # h1 is re-cast to bf16 only as the MXU operand (a convert, no bf16 VALU math).
    h2 = jnp.dot(h1.astype(w2_ref.dtype), w2_ref[...],
                 preferred_element_type=jnp.float32)
    h2 = jnp.maximum(h2 + b2_ref[...], 0.0)                # [tm, C2] f32

    # final linear projection; BN2 affine pre-folded into w3/b3.
    out = jnp.dot(h2.astype(w3_ref.dtype), w3_ref[...],
                  preferred_element_type=jnp.float32)
    o_ref[...] = (out + b3_ref[...]).astype(o_ref.dtype)


# ------------------------------ wrapper ------------------------------------ #
def patch_bands_encoding(ts, folded_params, *, tm=2048, out_dtype=jnp.bfloat16):
    """ts: [N, S, B] -> [N, S, E] out_dtype (default bf16; accumulation in f32)."""
    w1, b1, w2, b2, w3, b3 = folded_params

    N, S, B = ts.shape
    M = N * S
    C1P1 = w1.shape[1]
    C2 = w2.shape[1]
    E = w3.shape[1]

    # Row tile selection:
    #  * never larger than the (16-aligned) problem,
    #  * guarantee >= 2 grid steps whenever there are >= 2 tiles worth of rows,
    #    so the "parallel" axis can shard across v7x's 2 TensorCores,
    #  * ragged tail handled by zero padding + final slice.
    # VMEM note (lane padding!): each x buffer is tm*128*2 B, each out buffer
    # tm*256*2 B; at tm=2048 ==> x 2x0.5 MiB + out 2x1 MiB + weights ~0.2 MiB
    # + f32 intermediates (h1/h2/out) ~4-5 MiB ~= 8-9 MiB total.
    M_align = _round_up(M, _SUBLANE)
    tm_eff = max(_SUBLANE, min(tm, M_align))
    if M_align >= 2 * _SUBLANE:
        tm_eff = min(tm_eff, _round_up(-(-M_align // 2), _SUBLANE))
    grid_m = pl.cdiv(M, tm_eff)
    M_pad = grid_m * tm_eff

    x = ts.reshape(M, B).astype(w1.dtype)   # bf16 operand for the first MXU dot
    if M_pad != M:
        x = jnp.pad(x, ((0, M_pad - M), (0, 0)))

    full = lambda i: (0, 0)   # weights/biases: same (resident) block every step
    rows = lambda i: (i, 0)   # activations: tile along rows

    out = pl.pallas_call(
        _bands_kernel,
        out_shape=jax.ShapeDtypeStruct((M_pad, E), out_dtype),
        grid_spec=pltpu.PrefetchScalarGridSpec(
            num_scalar_prefetch=0,
            grid=(grid_m,),
            in_specs=[
                pl.BlockSpec((tm_eff, B), rows),     # x rows           (bf16)
                pl.BlockSpec((B, C1P1), full),       # conv1 folded w   (bf16)
                pl.BlockSpec((1, C1P1), full),       # conv1 bias       (f32)
                pl.BlockSpec((C1P1, C2), full),      # conv2 w (BN1 in) (bf16)
                pl.BlockSpec((1, C2), full),         # conv2 b (BN1 in) (f32)
                pl.BlockSpec((C2, E), full),         # linear w (BN2 in)(bf16)
                pl.BlockSpec((1, E), full),          # linear b (BN2 in)(f32)
            ],
            out_specs=pl.BlockSpec((tm_eff, E), rows),
        ),
        compiler_params=pltpu.CompilerParams(
            dimension_semantics=("parallel",),
            vmem_limit_bytes=32 * 1024 * 1024),
    )(x, w1, b1, w2, b2, w3, b3)

    if M_pad != M:
        out = out[:M]
    return out.reshape(N, S, E)


# ---------------------- parameter init + weight folding -------------------- #
def init_params(key, channels=(32, 64, 256), kernels=(5, 5)):
    C1, C2, E = channels
    K1, K2 = kernels
    ks = jax.random.split(key, 15)
    f32 = jnp.float32
    return dict(
        w1=0.1 * jax.random.normal(ks[0], (C1, 1, K1), f32),
        b1=0.1 * jax.random.normal(ks[1], (C1,), f32),
        g1=1.0 + 0.1 * jax.random.normal(ks[2], (C1,), f32),
        beta1=0.1 * jax.random.normal(ks[3], (C1,), f32),
        mean1=0.1 * jax.random.normal(ks[4], (C1,), f32),
        var1=jax.random.uniform(ks[5], (C1,), f32, 0.5, 1.5),
        w2=0.1 * jax.random.normal(ks[6], (C2, C1, K2), f32),
        b2=0.1 * jax.random.normal(ks[7], (C2,), f32),
        g2=1.0 + 0.1 * jax.random.normal(ks[8], (C2,), f32),
        beta2=0.1 * jax.random.normal(ks[9], (C2,), f32),
        mean2=0.1 * jax.random.normal(ks[10], (C2,), f32),
        var2=jax.random.uniform(ks[11], (C2,), f32, 0.5, 1.5),
        w3=0.1 * jax.random.normal(ks[12], (E, C2), f32),
        b3=0.1 * jax.random.normal(ks[13], (E,), f32),
    )


def fold_params(p, channels=(32, 64, 256), kernels=(5, 5), eps=1e-5,
                compute_dtype=jnp.bfloat16):
    """Fold conv1 im2col into [B, C1*P1], conv2 into [C1*P1, C2], linear into
    [C2, E]; fold the eval-mode BN affines into the FOLLOWING weight/bias.
    All folding is done in f32; weights are cast to compute_dtype (bf16) for
    the MXU, biases stay f32."""
    C1, C2, E = channels
    K1, K2 = kernels
    B = K1 + K2 - 1          # 9: required so conv2 output width == 1
    P1 = B - K1 + 1          # == K2

    # conv1 folded weights: W1[j, c*P1 + pos] = w1[c, 0, j - pos]  (valid conv)
    j = jnp.arange(B)[:, None]                       # [B, 1]
    cp = jnp.arange(C1 * P1)[None, :]                # [1, C1*P1]
    c = cp // P1
    pos = cp % P1
    k = j - pos
    valid = (k >= 0) & (k < K1)
    w1_big = jnp.where(valid, p["w1"][c, 0, jnp.clip(k, 0, K1 - 1)], 0.0)
    b1_big = jnp.repeat(p["b1"], P1)[None, :]        # [1, C1*P1]

    # BN1 affine (eval mode), per conv1 channel, replicated over positions
    s1c = p["g1"] / jnp.sqrt(p["var1"] + eps)
    t1c = p["beta1"] - p["mean1"] * s1c
    s1_big = jnp.repeat(s1c, P1)                     # [C1*P1]
    t1_big = jnp.repeat(t1c, P1)                     # [C1*P1]

    # conv2 (width-1 output) == dense over flattened (c1, k) with k == pos
    w2_flat = p["w2"].reshape(C2, C1 * K2).T         # [C1*P1, C2]
    # Fold BN1:  conv2(s1*h + t1) = (diag(s1) @ w2) h + (t1 @ w2) + b2
    w2_f = w2_flat * s1_big[:, None]
    b2_f = (p["b2"] + t1_big @ w2_flat)[None, :]     # [1, C2]

    # Fold BN2 into the linear layer the same way
    s2c = p["g2"] / jnp.sqrt(p["var2"] + eps)
    t2c = p["beta2"] - p["mean2"] * s2c
    w3_t = p["w3"].T                                 # [C2, E]
    w3_f = w3_t * s2c[:, None]
    b3_f = (p["b3"] + t2c @ w3_t)[None, :]           # [1, E]

    folded = (w1_big.astype(compute_dtype), b1_big,
              w2_f.astype(compute_dtype), b2_f,
              w3_f.astype(compute_dtype), b3_f)
    return folded, B


# --------------------------- pure-JAX reference ----------------------------- #
def reference(ts, p, channels=(32, 64, 256), kernels=(5, 5), eps=1e-5):
    C1, C2, E = channels
    K1, K2 = kernels
    N, S, B = ts.shape
    M = N * S
    x = ts.reshape(M, B)

    P1 = B - K1 + 1
    patches = jnp.stack([x[:, pp:pp + K1] for pp in range(P1)], axis=1)  # [M,P1,K1]
    h1 = jnp.einsum("mpk,ck->mcp", patches, p["w1"][:, 0, :]) + p["b1"][None, :, None]
    h1 = jnp.maximum(h1, 0.0)
    h1 = ((h1 - p["mean1"][None, :, None]) / jnp.sqrt(p["var1"] + eps)[None, :, None]
          * p["g1"][None, :, None] + p["beta1"][None, :, None])

    # conv2: kernel covers the whole remaining width -> output width 1
    h2 = jnp.einsum("mck,dck->md", h1, p["w2"]) + p["b2"][None, :]
    h2 = jnp.maximum(h2, 0.0)
    h2 = ((h2 - p["mean2"][None, :]) / jnp.sqrt(p["var2"] + eps)[None, :]
          * p["g2"][None, :] + p["beta2"][None, :])

    out = h2 @ p["w3"].T + p["b3"][None, :]
    return out.reshape(N, S, E)


# ---------------------------------- main ------------------------------------ #
if __name__ == "__main__":
    channels = (32, 64, 256)
    kernels = (5, 5)

    key = jax.random.PRNGKey(0)
    pkey, xkey1, xkey2 = jax.random.split(key, 3)

    params = init_params(pkey, channels, kernels)
    folded, B = fold_params(params, channels, kernels)

    run = jax.jit(functools.partial(patch_bands_encoding, tm=2048))

    # bf16 operands + bf16 output vs f32 reference -> loose tolerances.
    ATOL = 5e-2
    RTOL = 5e-2

    # Case 1: small, tile == problem (no padding path, single grid step).
    N, S = 2, 8                        # B = 9 is forced by the module
    ts = jax.random.normal(xkey1, (N, S, B), jnp.float32)
    out = jax.block_until_ready(run(ts, folded))
    ref = jax.block_until_ready(reference(ts, params, channels, kernels))
    assert out.shape == (N, S, channels[2]), out.shape
    assert out.dtype == jnp.bfloat16, out.dtype
    err = float(jnp.max(jnp.abs(out.astype(jnp.float32) - ref)))
    assert jnp.allclose(out.astype(jnp.float32), ref, atol=ATOL, rtol=RTOL), err

    # Case 2: N*S not a multiple of the tile — exercises ragged-tail padding
    # and the >=2-grid-step (multi-TC) path.
    N2, S2 = 3, 37
    ts2 = jax.random.normal(xkey2, (N2, S2, B), jnp.float32)
    out2 = jax.block_until_ready(run(ts2, folded))
    ref2 = jax.block_until_ready(reference(ts2, params, channels, kernels))
    assert out2.shape == (N2, S2, channels[2]), out2.shape
    err2 = float(jnp.max(jnp.abs(out2.astype(jnp.float32) - ref2)))
    assert jnp.allclose(out2.astype(jnp.float32), ref2, atol=ATOL, rtol=RTOL), err2

    print("KERNEL_OK")
</pallas_src>

<mosaic_0001>
module attributes {stable_mosaic.version = 11 : i64} {
  func.func @_bands_kernel(%arg0: i32, %arg1: memref<16x9xbf16, #tpu.memory_space<vmem>>, %arg2: memref<9x160xbf16, #tpu.memory_space<vmem>>, %arg3: memref<1x160xf32, #tpu.memory_space<vmem>>, %arg4: memref<160x64xbf16, #tpu.memory_space<vmem>>, %arg5: memref<1x64xf32, #tpu.memory_space<vmem>>, %arg6: memref<64x256xbf16, #tpu.memory_space<vmem>>, %arg7: memref<1x256xf32, #tpu.memory_space<vmem>>, %arg8: memref<16x256xbf16, #tpu.memory_space<vmem>>) attributes {dimension_semantics = [#tpu.dimension_semantics<parallel>], iteration_bounds = array<i64: 1>, scalar_prefetch = 0 : i64, scratch_operands = 0 : i64, tpu.core_type = #tpu.core_type<tc>, window_params = [{transform_indices = @transform_0, window_bounds = array<i64: 16, 9>}, {pipeline_mode = #tpu.pipeline_mode<synchronous>, transform_indices = @transform_1, window_bounds = array<i64: 9, 160>}, {pipeline_mode = #tpu.pipeline_mode<synchronous>, transform_indices = @transform_2, window_bounds = array<i64: 1, 160>}, {pipeline_mode = #tpu.pipeline_mode<synchronous>, transform_indices = @transform_3, window_bounds = array<i64: 160, 64>}, {pipeline_mode = #tpu.pipeline_mode<synchronous>, transform_indices = @transform_4, window_bounds = array<i64: 1, 64>}, {pipeline_mode = #tpu.pipeline_mode<synchronous>, transform_indices = @transform_5, window_bounds = array<i64: 64, 256>}, {pipeline_mode = #tpu.pipeline_mode<synchronous>, transform_indices = @transform_6, window_bounds = array<i64: 1, 256>}, {transform_indices = @transform_7, window_bounds = array<i64: 16, 256>}]} {
    %c0 = arith.constant 0 : index
    %c0_0 = arith.constant 0 : index
    %0 = vector.load %arg1[%c0, %c0_0] : memref<16x9xbf16, #tpu.memory_space<vmem>>, vector<16x9xbf16>
    %c0_1 = arith.constant 0 : index
    %c0_2 = arith.constant 0 : index
    %1 = vector.load %arg2[%c0_1, %c0_2] : memref<9x160xbf16, #tpu.memory_space<vmem>>, vector<9x160xbf16>
    %cst = arith.constant dense<0.000000e+00> : vector<16x160xf32>
    %2 = tpu.matmul %0, %1, %cst {dimension_numbers = #tpu.dot_dimension_numbers<[1], [0], [0], [1], [0, 0, 1, 1], [], []>} : vector<16x9xbf16>, vector<9x160xbf16>, vector<16x160xf32> -> vector<16x160xf32>
    %c0_3 = arith.constant 0 : index
    %c0_4 = arith.constant 0 : index
    %3 = vector.load %arg3[%c0_3, %c0_4] : memref<1x160xf32, #tpu.memory_space<vmem>>, vector<1x160xf32>
    %4 = vector.broadcast %3 : vector<1x160xf32> to vector<16x160xf32>
    %5 = arith.addf %2, %4 : vector<16x160xf32>
    %cst_5 = arith.constant 0.000000e+00 : f32
    %6 = vector.broadcast %cst_5 : f32 to vector<16x160xf32>
    %7 = arith.maximumf %5, %6 : vector<16x160xf32>
    %8 = arith.truncf %7 : vector<16x160xf32> to vector<16x160xbf16>
    %c0_6 = arith.constant 0 : index
    %c0_7 = arith.constant 0 : index
    %9 = vector.load %arg4[%c0_6, %c0_7] : memref<160x64xbf16, #tpu.memory_space<vmem>>, vector<160x64xbf16>
    %cst_8 = arith.constant dense<0.000000e+00> : vector<16x64xf32>
    %10 = tpu.matmul %8, %9, %cst_8 {dimension_numbers = #tpu.dot_dimension_numbers<[1], [0], [0], [1], [0, 0, 1, 1], [], []>} : vector<16x160xbf16>, vector<160x64xbf16>, vector<16x64xf32> -> vector<16x64xf32>
    %c0_9 = arith.constant 0 : index
    %c0_10 = arith.constant 0 : index
    %11 = vector.load %arg5[%c0_9, %c0_10] : memref<1x64xf32, #tpu.memory_space<vmem>>, vector<1x64xf32>
    %12 = vector.broadcast %11 : vector<1x64xf32> to vector<16x64xf32>
    %13 = arith.addf %10, %12 : vector<16x64xf32>
    %cst_11 = arith.constant 0.000000e+00 : f32
    %14 = vector.broadcast %cst_11 : f32 to vector<16x64xf32>
    %15 = arith.maximumf %13, %14 : vector<16x64xf32>
    %16 = arith.truncf %15 : vector<16x64xf32> to vector<16x64xbf16>
    %c0_12 = arith.constant 0 : index
    %c0_13 = arith.constant 0 : index
    %17 = vector.load %arg6[%c0_12, %c0_13] : memref<64x256xbf16, #tpu.memory_space<vmem>>, vector<64x256xbf16>
    %cst_14 = arith.constant dense<0.000000e+00> : vector<16x256xf32>
    %18 = tpu.matmul %16, %17, %cst_14 {dimension_numbers = #tpu.dot_dimension_numbers<[1], [0], [0], [1], [0, 0, 1, 1], [], []>} : vector<16x64xbf16>, vector<64x256xbf16>, vector<16x256xf32> -> vector<16x256xf32>
    %c0_15 = arith.constant 0 : index
    %c0_16 = arith.constant 0 : index
    %19 = vector.load %arg7[%c0_15, %c0_16] : memref<1x256xf32, #tpu.memory_space<vmem>>, vector<1x256xf32>
    %20 = vector.broadcast %19 : vector<1x256xf32> to vector<16x256xf32>
    %21 = arith.addf %18, %20 : vector<16x256xf32>
    %22 = arith.truncf %21 : vector<16x256xf32> to vector<16x256xbf16>
    %c0_17 = arith.constant 0 : index
    %c0_18 = arith.constant 0 : index
    %23 = vector.load %arg8[%c0_17, %c0_18] : memref<16x256xbf16, #tpu.memory_space<vmem>>, vector<16x256xbf16>
    tpu.vector_store %arg8[%c0_17, %c0_18], %22 {strides = array<i32>} : memref<16x256xbf16, #tpu.memory_space<vmem>>, vector<16x256xbf16>,
    return
  }
  func.func @transform_0(%arg0: i32) -> (i32, i32) {
    %c0_i32 = arith.constant 0 : i32
    %c0_i32_0 = arith.constant 0 : i32
    return %arg0, %c0_i32 : i32, i32
  }
  func.func @transform_1(%arg0: i32) -> (i32, i32) {
    %c0_i32 = arith.constant 0 : i32
    %c0_i32_0 = arith.constant 0 : i32
    %c0_i32_1 = arith.constant 0 : i32
    return %c0_i32, %c0_i32_0 : i32, i32
  }
  func.func @transform_2(%arg0: i32) -> (i32, i32) {
    %c0_i32 = arith.constant 0 : i32
    %c0_i32_0 = arith.constant 0 : i32
    %c0_i32_1 = arith.constant 0 : i32
    return %c0_i32, %c0_i32_0 : i32, i32
  }
  func.func @transform_3(%arg0: i32) -> (i32, i32) {
    %c0_i32 = arith.constant 0 : i32
    %c0_i32_0 = arith.constant 0 : i32
    %c0_i32_1 = arith.constant 0 : i32
    return %c0_i32, %c0_i32_0 : i32, i32
  }
  func.func @transform_4(%arg0: i32) -> (i32, i32) {
    %c0_i32 = arith.constant 0 : i32
    %c0_i32_0 = arith.constant 0 : i32
    %c0_i32_1 = arith.constant 0 : i32
    return %c0_i32, %c0_i32_0 : i32, i32
  }
  func.func @transform_5(%arg0: i32) -> (i32, i32) {
    %c0_i32 = arith.constant 0 : i32
    %c0_i32_0 = arith.constant 0 : i32
    %c0_i32_1 = arith.constant 0 : i32
    return %c0_i32, %c0_i32_0 : i32, i32
  }
  func.func @transform_6(%arg0: i32) -> (i32, i32) {
    %c0_i32 = arith.constant 0 : i32
    %c0_i32_0 = arith.constant 0 : i32
    %c0_i32_1 = arith.constant 0 : i32
    return %c0_i32, %c0_i32_0 : i32, i32
  }
  func.func @transform_7(%arg0: i32) -> (i32, i32) {
    %c0_i32 = arith.constant 0 : i32
    %c0_i32_0 = arith.constant 0 : i32
    return %arg0, %c0_i32 : i32, i32
  }
}

</mosaic_0001>

<llo_original>
// kernel: patch_bands_encoding.1
$region0: #{patch_bands_encoding.1}
  #allocation0 [shape = 'u32[]', space=smem, size = 0x4, offset = 0x4, fixed_abs, tag = 'smem constant byte address 0x4 - core index']
  #allocation1 [shape = 'u32[144,128]{1,0:T(1,128)}', space=vmem, size = 0x12000, scoped, tag = 'internal scratch']
  %s0 = inlined_call_operand.vmem [shape: bf16[16,9], index: 0, kind: input, shape index: {}]
  %s1 = inlined_call_operand.vmem [shape: bf16[9,160], index: 1, kind: input, shape index: {}]
  %s2 = inlined_call_operand.vmem [shape: f32[1,160], index: 2, kind: input, shape index: {}]
  %s3 = inlined_call_operand.vmem [shape: bf16[160,64], index: 3, kind: input, shape index: {}]
  %s4 = inlined_call_operand.vmem [shape: f32[1,64], index: 4, kind: input, shape index: {}]
  %s5 = inlined_call_operand.vmem [shape: bf16[64,256], index: 5, kind: input, shape index: {}]
  %s6 = inlined_call_operand.vmem [shape: f32[1,256], index: 6, kind: input, shape index: {}]
  %s7 = inlined_call_operand.hbm [shape: bf16[16,256], index: 7, kind: output, shape index: {}]
  %s8 = sld [smem:[#allocation0]]
  $region38: #{patch_bands_encoding.1} parent=0
    _
  %s10 = ssub.s32 1, %s8
  %s11 = scalar_select 0, %s10, %s8
  $region1: #{patch_bands_encoding.1} parent=0
    #allocation2 [shape = 'u8[8192]{0}', space=vmem, size = 0x2000, scoped, tag = 'output window, operand 0, single buffered']
    #allocation3 [shape = 's32[1]{0}', space=sflag, size = 0x4, scoped, tag = 'scoped memory for patch_bands_encoding.1']
    %12 = vsyncpa [#allocation3], 0
    // Predicated region
    $region2: #{patch_bands_encoding.1} parent=1 // pred_check
      _
    $region3: #{patch_bands_encoding.1} parent=1 // pred_check_branch
      %14 = sbr.rel (0) target = $region5
    $region4: #{patch_bands_encoding.1} parent=1 // pred_region
      _
    $region5: #{patch_bands_encoding.1} parent=1 // pred_fallthru
      _
    // Predicated region
    $region6: #{patch_bands_encoding.1} parent=1 // pred_check
      _
    $region7: #{patch_bands_encoding.1} parent=1 // pred_check_branch
      %16 = sbr.rel (0) target = $region9
    $region8: #{patch_bands_encoding.1} parent=1 // pred_region
      _
    $region9: #{patch_bands_encoding.1} parent=1 // pred_fallthru
      _
    // Predicated region
    $region10: #{patch_bands_encoding.1} parent=1 // pred_check
      _
    $region11: #{patch_bands_encoding.1} parent=1 // pred_check_branch
      %18 = sbr.rel (0) target = $region13
    $region12: #{patch_bands_encoding.1} parent=1 // pred_region
      _
    $region13: #{patch_bands_encoding.1} parent=1 // pred_fallthru
      _
    // Predicated region
    $region14: #{patch_bands_encoding.1} parent=1 // pred_check
      _
    $region15: #{patch_bands_encoding.1} parent=1 // pred_check_branch
      %20 = sbr.rel (0) target = $region17
    $region16: #{patch_bands_encoding.1} parent=1 // pred_region
      _
    $region17: #{patch_bands_encoding.1} parent=1 // pred_fallthru
      _
    // Predicated region
    $region18: #{patch_bands_encoding.1} parent=1 // pred_check
      _
    $region19: #{patch_bands_encoding.1} parent=1 // pred_check_branch
      %22 = sbr.rel (0) target = $region21
    $region20: #{patch_bands_encoding.1} parent=1 // pred_region
      _
    $region21: #{patch_bands_encoding.1} parent=1 // pred_fallthru
      _
    // Predicated region
    $region22: #{patch_bands_encoding.1} parent=1 // pred_check
      _
    $region23: #{patch_bands_encoding.1} parent=1 // pred_check_branch
      %24 = sbr.rel (0) target = $region25
    $region24: #{patch_bands_encoding.1} parent=1 // pred_region
      _
    $region25: #{patch_bands_encoding.1} parent=1 // pred_fallthru
      _
    // Predicated region
    $region26: #{patch_bands_encoding.1} parent=1 // pred_check
      _
    $region27: #{patch_bands_encoding.1} parent=1 // pred_check_branch
      %26 = sbr.rel (0) target = $region29
    $region28: #{patch_bands_encoding.1} parent=1 // pred_region
      _
    $region29: #{patch_bands_encoding.1} parent=1 // pred_fallthru
      _
    %v28 = vld [vmem:[%s0] sm:$0xf]
    %v29 = vld [vmem:[%s0 + $0x4] sm:$0xf]
    %v30 = vld [vmem:[%s1] sm:$0xff]
    %v31 = vld [vmem:[%s1 + $0x8] sm:$0x11]
    %v32 = vld [vmem:[%s2] sm:$0x3]
    %v34 = vlaneseq
    %v35 = vshrl.u32 %v34, 7
    %v36 = vsub.s32 0, %v35
    %v37 = vrot.slane %v32, %v36
    %v38 = vlaneseq
    %v39 = vshrl.u32 %v38, 7
    %v40 = vsub.s32 1, %v39
    %v41 = vrot.slane %v32, %v40
    %v46 = vunpack.c.l.b16 %v28
    %v47 = vunpack.c.l.b16 %v29
    %v48 = vpack.c.b16 %v47, %v46
    %v51 = vunpack.c.l.b16 %v30
    %v52 = vunpack.c.h.b16 %v30
    %v53 = vunpack.c.l.b16 %v31
    %v54 = vunpack.c.h.b16 %v31
    %v55 = vpack.c.b16 %v53, %v51
    %v56 = vpack.c.b16 %v54, %v52
    %vm57 = vcmask 72704
    %v59 = vsel %vm57, %v48, 0
    %vm61 = vcmask 1043456
    %vm62 = vcmask 1044480
    %v63 = vsel %vm61, 4294967295, 65535
    %v64 = vsel %vm62, %v63, 0
    %v66 = vand.u32 %v55, %v64
    %v69 = vand.u32 %v56, %v64
    %71 = vmatprep.subr.bf16.mxu0 %v69
    %72 = vmatpush1.bf16.msra.mxu0 %v66
    %73 = vmatprep.subr.bf16.mxu0 0
    %74 = vmatpush1.bf16.msra.mxu0 0
    %75 = vmatprep.subr.bf16.mxu0 0
    %76 = vmatpush1.bf16.msra.mxu0 0
    %77 = vmatprep.subr.bf16.mxu0 0
    %78 = vmatpush1.bf16.msra.mxu0 0
    %79 = vmatprep.subr.bf16.mxu0 0
    %80 = vmatpush1.bf16.msra.mxu0 0
    %81 = vmatprep.subr.bf16.mxu0 0
    %82 = vmatpush1.bf16.msra.mxu0 0
    %83 = vmatprep.subr.bf16.mxu0 0
    %84 = vmatpush1.bf16.msra.mxu0 0
    %85 = vmatprep.subr.bf16.mxu0 0
    %86 = vmatpush1.bf16.msra.mxu0 0
    %87 = vmatprep.subr.bf16.mxu0 0
    %88 = vmatpush1.bf16.msra.mxu0 0
    %89 = vmatprep.subr.bf16.mxu0 0
    %90 = vmatpush1.bf16.msra.mxu0 0
    %91 = vmatprep.subr.bf16.mxu0 0
    %92 = vmatpush1.bf16.msra.mxu0 0
    %93 = vmatprep.subr.bf16.mxu0 0
    %94 = vmatpush1.bf16.msra.mxu0 0
    %95 = vmatprep.subr.bf16.mxu0 0
    %96 = vmatpush1.bf16.msra.mxu0 0
    %97 = vmatprep.subr.bf16.mxu0 0
    %98 = vmatpush1.bf16.msra.mxu0 0
    %99 = vmatprep.subr.bf16.mxu0 0
    %100 = vmatpush1.bf16.msra.mxu0 0
    %101 = vmatprep.subr.bf16.mxu0 0
    %102 = vmatpush1.bf16.msra.mxu0 0
    %103 = vmatprep.mubr.bf16.mxu0 0
    %104 = vmatmul.mubr.bf16.gmra.mrb[0].mxu0 %v59
    %v105 = vpop.f32.mrb[0].mxu0
    %v106 = vadd.f32 %v37, %v105
    %v107 = vpop.f32.mrb[0].mxu0
    %v108 = vadd.f32 %v41, %v107
    %v109 = vpop.f32.mrb[0].mxu0
    %v110 = vadd.f32 %v37, %v109
    %v111 = vpop.f32.mrb[0].mxu0
    %v112 = vadd.f32 %v41, %v111
    %113 = vdwg.mxu0
    %v114 = vmax.f32 %v106, 0.0
    %v115 = vmax.f32 %v108, 0.0
    %v116 = vmax.f32 %v110, 0.0
    %v117 = vmax.f32 %v112, 0.0
    %v118 = vpack.c.bf16 %v116, %v114
    %v119 = vpack.c.bf16 %v117, %v115
    %v120 = vld [vmem:[%s3] sm:$0xf]
    %v121 = vld [vmem:[%s3 + $0x4] sm:$0xf]
    %v122 = vld [vmem:[%s3 + $0x8] sm:$0xf]
    %v123 = vld [vmem:[%s3 + $0xc] sm:$0xf]
    %v124 = vld [vmem:[%s3 + $0x10] sm:$0xf]
    %v125 = vld [vmem:[%s3 + $0x14] sm:$0xf]
    %v126 = vld [vmem:[%s3 + $0x18] sm:$0xf]
    %v127 = vld [vmem:[%s3 + $0x1c] sm:$0xf]
    %v128 = vld [vmem:[%s3 + $0x20] sm:$0xf]
    %v129 = vld [vmem:[%s3 + $0x24] sm:$0xf]
    %v130 = vld [vmem:[%s3 + $0x28] sm:$0xf]
    %v131 = vld [vmem:[%s3 + $0x2c] sm:$0xf]
    %v132 = vld [vmem:[%s3 + $0x30] sm:$0xf]
    %v133 = vld [vmem:[%s3 + $0x34] sm:$0xf]
    %v134 = vld [vmem:[%s3 + $0x38] sm:$0xf]
    %v135 = vld [vmem:[%s3 + $0x3c] sm:$0xf]
    %v136 = vld [vmem:[%s3 + $0x40] sm:$0xf]
    %v137 = vld [vmem:[%s3 + $0x44] sm:$0xf]
    %v138 = vld [vmem:[%s3 + $0x48] sm:$0xf]
    %v139 = vld [vmem:[%s3 + $0x4c] sm:$0xf]
    %v140 = vld [vmem:[%s4] sm:$0x1]
    %v142 = vlaneseq
    %v143 = vshrl.u32 %v142, 7
    %v144 = vsub.s32 0, %v143
    %v145 = vrot.slane %v140, %v144
    %v167 = vunpack.c.l.b16 %v120
    %v168 = vunpack.c.l.b16 %v121
    %v169 = vunpack.c.l.b16 %v122
    %v170 = vunpack.c.l.b16 %v123
    %v171 = vunpack.c.l.b16 %v124
    %v172 = vunpack.c.l.b16 %v125
    %v173 = vunpack.c.l.b16 %v126
    %v174 = vunpack.c.l.b16 %v127
    %v175 = vunpack.c.l.b16 %v128
    %v176 = vunpack.c.l.b16 %v129
    %v177 = vunpack.c.l.b16 %v130
    %v178 = vunpack.c.l.b16 %v131
    %v179 = vunpack.c.l.b16 %v132
    %v180 = vunpack.c.l.b16 %v133
    %v181 = vunpack.c.l.b16 %v134
    %v182 = vunpack.c.l.b16 %v135
    %v183 = vunpack.c.l.b16 %v136
    %v184 = vunpack.c.l.b16 %v137
    %v185 = vunpack.c.l.b16 %v138
    %v186 = vunpack.c.l.b16 %v139
    %v187 = vpack.c.b16 %v168, %v167
    %v188 = vpack.c.b16 %v170, %v169
    %v189 = vpack.c.b16 %v172, %v171
    %v190 = vpack.c.b16 %v174, %v173
    %v191 = vpack.c.b16 %v176, %v175
    %v192 = vpack.c.b16 %v178, %v177
    %v193 = vpack.c.b16 %v180, %v179
    %v194 = vpack.c.b16 %v182, %v181
    %v195 = vpack.c.b16 %v184, %v183
    %v196 = vpack.c.b16 %v186, %v185
    %vm207 = vcmask 261120
    %v209 = vsel %vm207, %v119, 0
    %211 = vmatprep.subr.bf16.mxu0 0
    %212 = vmatpush1.bf16.msra.mxu0 %v187
    %213 = vmatprep.subr.bf16.mxu0 0
    %214 = vmatpush1.bf16.msra.mxu0 %v188
    %215 = vmatprep.subr.bf16.mxu0 0
    %216 = vmatpush1.bf16.msra.mxu0 %v189
    %217 = vmatprep.subr.bf16.mxu0 0
    %218 = vmatpush1.bf16.msra.mxu0 %v190
    %219 = vmatprep.subr.bf16.mxu0 0
    %220 = vmatpush1.bf16.msra.mxu0 %v191
    %221 = vmatprep.subr.bf16.mxu0 0
    %222 = vmatpush1.bf16.msra.mxu0 %v192
    %223 = vmatprep.subr.bf16.mxu0 0
    %224 = vmatpush1.bf16.msra.mxu0 %v193
    %225 = vmatprep.subr.bf16.mxu0 0
    %226 = vmatpush1.bf16.msra.mxu0 %v194
    %227 = vmatprep.subr.bf16.mxu0 0
    %228 = vmatpush1.bf16.msra.mxu0 %v195
    %229 = vmatprep.subr.bf16.mxu0 0
    %230 = vmatpush1.bf16.msra.mxu0 %v196
    %231 = vmatprep.subr.bf16.mxu0 0
    %232 = vmatpush1.bf16.msra.mxu0 0
    %233 = vmatprep.subr.bf16.mxu0 0
    %234 = vmatpush1.bf16.msra.mxu0 0
    %235 = vmatprep.subr.bf16.mxu0 0
    %236 = vmatpush1.bf16.msra.mxu0 0
    %237 = vmatprep.subr.bf16.mxu0 0
    %238 = vmatpush1.bf16.msra.mxu0 0
    %239 = vmatprep.subr.bf16.mxu0 0
    %240 = vmatpush1.bf16.msra.mxu0 0
    %241 = vmatprep.subr.bf16.mxu0 0
    %242 = vmatpush1.bf16.msra.mxu0 0
    %243 = vmatprep.mubr.bf16.mxu0 %v209
    %244 = vmatmul.mubr.bf16.gmra.mrb[0].mxu0 %v118
    %v245 = vpop.f32.mrb[0].mxu0
    %v246 = vadd.f32 %v145, %v245
    %v247 = vpop.f32.mrb[0].mxu0
    %v248 = vpop.f32.mrb[0].mxu0
    %v249 = vadd.f32 %v145, %v248
    %v250 = vpop.f32.mrb[0].mxu0
    %251 = vdwg.mxu0
    %v252 = vmax.f32 %v246, 0.0
    %v253 = vmax.f32 %v249, 0.0
    %v254 = vpack.c.bf16 %v253, %v252
    %v255 = vld [vmem:[%s5] sm:$0xff]
    %v256 = vld [vmem:[%s5 + $0x8] sm:$0xff]
    %v257 = vld [vmem:[%s5 + $0x10] sm:$0xff]
    %v258 = vld [vmem:[%s5 + $0x18] sm:$0xff]
    %v259 = vld [vmem:[%s5 + $0x20] sm:$0xff]
    %v260 = vld [vmem:[%s5 + $0x28] sm:$0xff]
    %v261 = vld [vmem:[%s5 + $0x30] sm:$0xff]
    %v262 = vld [vmem:[%s5 + $0x38] sm:$0xff]
    %v263 = vld [vmem:[%s6] sm:$0x3]
    %v265 = vlaneseq
    %v266 = vshrl.u32 %v265, 7
    %v267 = vsub.s32 0, %v266
    %v268 = vrot.slane %v263, %v267
    %v269 = vlaneseq
    %v270 = vshrl.u32 %v269, 7
    %v271 = vsub.s32 1, %v270
    %v272 = vrot.slane %v263, %v271
    %v283 = vunpack.c.l.b16 %v255
    %v284 = vunpack.c.h.b16 %v255
    %v285 = vunpack.c.l.b16 %v256
    %v286 = vunpack.c.h.b16 %v256
    %v287 = vunpack.c.l.b16 %v257
    %v288 = vunpack.c.h.b16 %v257
    %v289 = vunpack.c.l.b16 %v258
    %v290 = vunpack.c.h.b16 %v258
    %v291 = vunpack.c.l.b16 %v259
    %v292 = vunpack.c.h.b16 %v259
    %v293 = vunpack.c.l.b16 %v260
    %v294 = vunpack.c.h.b16 %v260
    %v295 = vunpack.c.l.b16 %v261
    %v296 = vunpack.c.h.b16 %v261
    %v297 = vunpack.c.l.b16 %v262
    %v298 = vunpack.c.h.b16 %v262
    %v299 = vpack.c.b16 %v285, %v283
    %v300 = vpack.c.b16 %v286, %v284
    %v301 = vpack.c.b16 %v289, %v287
    %v302 = vpack.c.b16 %v290, %v288
    %v303 = vpack.c.b16 %v293, %v291
    %v304 = vpack.c.b16 %v294, %v292
    %v305 = vpack.c.b16 %v297, %v295
    %v306 = vpack.c.b16 %v298, %v296
    %vm315 = vcmask 523264
    %v317 = vsel %vm315, %v254, 0
    %319 = vmatprep.subr.bf16.mxu0 %v300
    %320 = vmatpush1.bf16.msra.mxu0 %v299
    %321 = vmatprep.subr.bf16.mxu0 %v302
    %322 = vmatpush1.bf16.msra.mxu0 %v301
    %323 = vmatprep.subr.bf16.mxu0 %v304
    %324 = vmatpush1.bf16.msra.mxu0 %v303
    %325 = vmatprep.subr.bf16.mxu0 %v306
    %326 = vmatpush1.bf16.msra.mxu0 %v305
    %327 = vmatprep.subr.bf16.mxu0 0
    %328 = vmatpush1.bf16.msra.mxu0 0
    %329 = vmatprep.subr.bf16.mxu0 0
    %330 = vmatpush1.bf16.msra.mxu0 0
    %331 = vmatprep.subr.bf16.mxu0 0
    %332 = vmatpush1.bf16.msra.mxu0 0
    %333 = vmatprep.subr.bf16.mxu0 0
    %334 = vmatpush1.bf16.msra.mxu0 0
    %335 = vmatprep.subr.bf16.mxu0 0
    %336 = vmatpush1.bf16.msra.mxu0 0
    %337 = vmatprep.subr.bf16.mxu0 0
    %338 = vmatpush1.bf16.msra.mxu0 0
    %339 = vmatprep.subr.bf16.mxu0 0
    %340 = vmatpush1.bf16.msra.mxu0 0
    %341 = vmatprep.subr.bf16.mxu0 0
    %342 = vmatpush1.bf16.msra.mxu0 0
    %343 = vmatprep.subr.bf16.mxu0 0
    %344 = vmatpush1.bf16.msra.mxu0 0
    %345 = vmatprep.subr.bf16.mxu0 0
    %346 = vmatpush1.bf16.msra.mxu0 0
    %347 = vmatprep.subr.bf16.mxu0 0
    %348 = vmatpush1.bf16.msra.mxu0 0
    %349 = vmatprep.subr.bf16.mxu0 0
    %350 = vmatpush1.bf16.msra.mxu0 0
    %351 = vmatprep.mubr.bf16.mxu0 0
    %352 = vmatmul.mubr.bf16.gmra.mrb[0].mxu0 %v317
    %v353 = vpop.f32.mrb[0].mxu0
    %v354 = vadd.f32 %v268, %v353
    %v355 = vpop.f32.mrb[0].mxu0
    %v356 = vadd.f32 %v272, %v355
    %v357 = vpop.f32.mrb[0].mxu0
    %v358 = vadd.f32 %v268, %v357
    %v359 = vpop.f32.mrb[0].mxu0
    %v360 = vadd.f32 %v272, %v359
    %361 = vdwg.mxu0
    %v362 = vpack.c.bf16 %v358, %v354
    %v363 = vpack.c.bf16 %v360, %v356
    %v366 = vunpack.c.l.b16 %v362
    %v367 = vunpack.c.l.b16 %v363
    %v368 = vunpack.c.h.b16 %v362
    %v369 = vunpack.c.h.b16 %v363
    %v370 = vpack.c.b16 %v367, %v366
    %v371 = vpack.c.b16 %v369, %v368
    %374 = vst [vmem:[#allocation2] sm:$0xff] %v370
    %375 = vst [vmem:[#allocation2 + $0x8] sm:$0xff] %v371
    // Predicated region
    $region30: #{patch_bands_encoding.1} parent=1 // pred_check
      _
    $region31: #{patch_bands_encoding.1} parent=1 // pred_check_branch
      %377 = sbr.rel (0) target = $region33
    $region32: #{patch_bands_encoding.1} parent=1 // pred_region
      %s379 = ssub.s32 256, 256
      %380 = vsyncadd [#allocation3], %s379
      %s381 = sshll.u32 [#allocation2], 4
      %s382 = int_to_ptr.vmem [resolvable:$true] %s381
      %387 = dma.vmem_to_hbm [thread:$0]  %s382, 256, %s7, [#allocation3], 128, 128, 8
    $region33: #{patch_bands_encoding.1} parent=1 // pred_fallthru
      _
    // Predicated region
    $region34: #{patch_bands_encoding.1} parent=1 // pred_check
      _
    $region35: #{patch_bands_encoding.1} parent=1 // pred_check_branch
      %389 = sbr.rel (0) target = $region37
    $region36: #{patch_bands_encoding.1} parent=1 // pred_region
      %390 = dma.done [#allocation3], 256
    $region37: #{patch_bands_encoding.1} parent=1 // pred_fallthru
      _
    %391 = vsyncpa [#allocation3], 1

</llo_original>
